<compile_context>
chip_gen: v6e
topology: v6e:2x2x1
jax: 0.10.0
libtpu: 0.0.40
codegen_flags: <defaults>
</compile_context>

<pallas_src>
import functools
import math

import jax
import jax.numpy as jnp
from jax.experimental import pallas as pl
from jax.experimental.pallas import tpu as pltpu


# ---------------------------------------------------------------------------
# Kernels
# ---------------------------------------------------------------------------
def _nlinear_kernel_bias(x_ref, w_ref, b_ref, o_ref):
    # x_ref: (TB, K), w_ref: (K, N)  [group dim squeezed], b_ref: (1, N)
    acc = jnp.dot(x_ref[...], w_ref[...], preferred_element_type=jnp.float32)
    o_ref[...] = (acc + b_ref[...].astype(jnp.float32)).astype(o_ref.dtype)


def _nlinear_kernel_nobias(x_ref, w_ref, o_ref):
    o_ref[...] = jnp.dot(
        x_ref[...], w_ref[...], preferred_element_type=jnp.float32
    ).astype(o_ref.dtype)


# ---------------------------------------------------------------------------
# Generation-aware sizing
# ---------------------------------------------------------------------------
def _tpu_params():
    """Conservative per-generation knobs keyed off VMEM capacity."""
    cap = None
    try:
        cap = getattr(pltpu.get_tpu_info(), "vmem_capacity_bytes", None)
    except Exception:
        cap = None
    if cap is not None and cap <= 80 * (1 << 20):
        # v7x-class: 64 MiB VMEM / TensorCore, ~3.2 TB/s HBM, ~1 PF/s bf16.
        return {"vmem_cap": cap, "vmem_budget": 24 << 20, "vmem_limit": 48 << 20,
                "mxu_bf16": 900e12, "hbm_bw": 3.0e12}
    if cap is not None and cap >= 100 * (1 << 20):
        # v5e / v6e: 128 MiB VMEM.  Use v5e's (lowest) compute/BW numbers so the
        # roofline guard is safe on both generations.
        return {"vmem_cap": cap, "vmem_budget": 56 << 20, "vmem_limit": 96 << 20,
                "mxu_bf16": 180e12, "hbm_bw": 0.8e12}
    # Unknown backend: be conservative (v7x-sized VMEM, v5e-sized compute).
    return {"vmem_cap": 64 << 20, "vmem_budget": 24 << 20, "vmem_limit": 48 << 20,
            "mxu_bf16": 180e12, "hbm_bw": 0.8e12}


def choose_f_tile(B, n_features, d_in, d_out, itemsize, params=None):
    """Number of features packed block-diagonally per group (shape-only, static)."""
    p = params or _tpu_params()
    a_in = 128 // math.gcd(d_in, 128)
    a_out = 128 // math.gcd(d_out, 128)
    f_min = (a_in * a_out) // math.gcd(a_in, a_out)        # lcm: 128-aligned K and N
    if f_min >= n_features:
        return n_features          # single group spanning the full feature axis

    f_tile = f_min
    mxu_peak = p["mxu_bf16"] if itemsize <= 2 else p["mxu_bf16"] / 4.0
    x_bytes = B * n_features * d_in * itemsize
    out_bytes = B * n_features * d_out * itemsize

    def ok(f):
        g = pl.cdiv(n_features, f)
        nf_pad = g * f
        packed_w = g * (f * d_in) * (f * d_out) * itemsize   # HBM bytes read / call
        w_block = 2 * (f * d_in) * (f * d_out) * itemsize    # double-buffered VMEM
        flops = 2.0 * B * nf_pad * f * d_in * d_out           # block-diag inflated
        hbm_bytes = x_bytes + out_bytes + packed_w
        return (f <= n_features
                and nf_pad <= n_features + max(n_features // 8, f)  # bounded padding
                and packed_w <= max(x_bytes // 2, 2 << 20)          # weight << x traffic
                and w_block <= p["vmem_budget"] // 4                # clamp weight block
                and flops / mxu_peak <= hbm_bytes / p["hbm_bw"])    # stay HBM-bound

    # Grow only toward 256-aligned K and N (v6e/v7x MXU width), never past the
    # point where the inflated FLOPs would make the kernel compute-bound.
    target = f_min
    while ((target * d_in) % 256 or (target * d_out) % 256) and target * 2 <= n_features:
        target *= 2
    while f_tile * 2 <= target and ok(f_tile * 2):
        f_tile *= 2
    return f_tile


def _choose_batch_tile(B, g, K, N, itemsize, p):
    align = 16 if itemsize == 2 else 8
    w_block = 2 * K * N * itemsize
    bias_block = 2 * N * itemsize
    per_row = 2 * (K + N) * itemsize                 # x + out, double-buffered
    avail = p["vmem_budget"] - w_block - bias_block
    if avail < p["vmem_budget"] // 4:
        # Weight block dominates (f_tile cannot legally shrink below alignment):
        # keep a sane streaming allowance; vmem_limit is raised to match below.
        avail = p["vmem_budget"] // 4
    rows_budget = max(align, avail // max(per_row, 1))
    rows_cap = max(align, (4 << 20) // max(max(K, N) * itemsize, 1))   # <= 4 MiB/block
    tb = min(B, rows_budget, rows_cap)
    if tb < B:
        tb = max(align, (tb // align) * align)
        tb = min(tb, B)
    # Keep >= 2 grid steps when there is a single feature group so v7x's two
    # TensorCores both get work (costs one extra ~0.35 us step on 1-core chips).
    if g == 1 and tb >= B and B >= 2 * align:
        tb = ((pl.cdiv(B, 2) + align - 1) // align) * align
    return tb


# ---------------------------------------------------------------------------
# Parameter packing (do this ONCE per parameter set, outside the hot path)
# ---------------------------------------------------------------------------
def pack_nlinear_params(weight, bias, f_tile, compute_dtype=None):
    """Pack per-feature weights block-diagonally into (groups, F*d_in, F*d_out)."""
    nf, d_in, d_out = weight.shape
    g = pl.cdiv(nf, f_tile)
    nf_pad = g * f_tile
    w = weight if compute_dtype is None else weight.astype(compute_dtype)
    if nf_pad != nf:
        w = jnp.pad(w, ((0, nf_pad - nf), (0, 0), (0, 0)))
    if f_tile == 1:
        w_packed = w                                      # (nf_pad, d_in, d_out)
    else:
        w_grp = w.reshape(g, f_tile, d_in, d_out)
        eye = jnp.eye(f_tile, dtype=w.dtype)
        w_packed = (w_grp[:, :, :, None, :] * eye[None, :, None, :, None]).reshape(
            g, f_tile * d_in, f_tile * d_out)
    b_packed = None
    if bias is not None:
        b = bias
        if nf_pad != nf:
            b = jnp.pad(b, ((0, nf_pad - nf), (0, 0)))
        b_packed = b.reshape(1, nf_pad * d_out)
    return w_packed, b_packed


# ---------------------------------------------------------------------------
# Forward (hot path: pre-packed parameters)
# ---------------------------------------------------------------------------
def nlinear_prepacked(x, w_packed, b_packed=None, *, f_tile, tb=None,
                      compute_dtype=None):
    assert x.ndim == 3, "x must be (batch, n_features, d_in)"
    B, nf, d_in = x.shape
    g, K, N = w_packed.shape
    assert K == f_tile * d_in, "packed weight does not match x / f_tile"
    d_out = N // f_tile
    assert N == f_tile * d_out
    nf_pad = g * f_tile
    assert g == pl.cdiv(nf, f_tile), "packed weight groups do not match n_features"
    if b_packed is not None:
        assert b_packed.shape == (1, nf_pad * d_out)

    p = _tpu_params()
    xc = x if compute_dtype is None else x.astype(compute_dtype)
    itemsize = jnp.dtype(xc.dtype).itemsize
    if tb is None:
        tb = _choose_batch_tile(B, g, K, N, itemsize, p)

    # Free reshape (merges trailing contiguous dims); zero-pad the feature tail so
    # the last group never feeds stale/OOB lanes into the MXU.
    x2 = xc.reshape(B, nf * d_in)
    if nf_pad != nf:
        x2 = jnp.pad(x2, ((0, 0), (0, (nf_pad - nf) * d_in)))

    grid = (g, pl.cdiv(B, tb))   # feature groups outer, batch inner (weight resident)

    in_specs = [
        pl.BlockSpec((tb, K), lambda fi, bi: (bi, fi)),
        # index_map ignores bi -> the packed weight block is fetched once per
        # feature group and stays resident in VMEM across all batch tiles.
        # Squeezed leading dim: the kernel sees a clean 2-D (K, N) ref.
        pl.BlockSpec((pl.Squeezed(), K, N), lambda fi, bi: (fi, 0, 0)),
    ]
    args = [x2, w_packed]
    if b_packed is not None:
        in_specs.append(pl.BlockSpec((1, N), lambda fi, bi: (0, fi)))
        args.append(b_packed)
    out_spec = pl.BlockSpec((tb, N), lambda fi, bi: (bi, fi))

    # VMEM actually needed (double-buffered blocks); raise the scoped limit to
    # cover it, capped well below physical capacity for the detected generation.
    needed = (2 * tb * (K + N) + 2 * K * N
              + (2 * N if b_packed is not None else 0)) * itemsize
    vmem_limit = int(min(p["vmem_cap"] * 3 // 4,
                         max(p["vmem_limit"], int(needed * 1.3) + (8 << 20))))

    flops = 2 * B * nf_pad * f_tile * d_in * d_out         # block-diag MXU flops
    bytes_accessed = int(
        x2.size * itemsize
        + w_packed.size * jnp.dtype(w_packed.dtype).itemsize
        + (b_packed.size * jnp.dtype(b_packed.dtype).itemsize
           if b_packed is not None else 0)
        + B * nf_pad * d_out * jnp.dtype(x.dtype).itemsize)
    cost = pl.CostEstimate(flops=int(flops), transcendentals=0,
                           bytes_accessed=bytes_accessed)

    kernel = _nlinear_kernel_nobias if b_packed is None else _nlinear_kernel_bias

    out2 = pl.pallas_call(
        kernel,
        out_shape=jax.ShapeDtypeStruct((B, nf_pad * d_out), x.dtype),
        grid_spec=pltpu.PrefetchScalarGridSpec(
            num_scalar_prefetch=0,
            grid=grid,
            in_specs=in_specs,
            out_specs=out_spec,
        ),
        compiler_params=pltpu.CompilerParams(
            dimension_semantics=("parallel", "parallel"),
            vmem_limit_bytes=vmem_limit,
        ),
        cost_estimate=cost,
    )(*args)

    out = out2.reshape(B, nf_pad, d_out)
    if nf_pad != nf:
        out = out[:, :nf, :]
    return out


def nlinear(x, weight, bias=None, compute_dtype=None):
    """One-shot convenience wrapper.

    NOTE: this re-packs the block-diagonal weight on every call (f_tile x the
    weight bytes of extra HBM traffic).  For repeated calls with fixed
    parameters, call choose_f_tile() / pack_nlinear_params() once and use
    nlinear_prepacked() as the hot-path forward.
    """
    assert x.ndim == 3
    B, nf, d_in = x.shape
    nf_w, d_in_w, d_out = weight.shape
    assert nf_w == nf and d_in_w == d_in
    if bias is not None:
        assert bias.shape == (nf, d_out)
    itemsize = jnp.dtype(x.dtype if compute_dtype is None else compute_dtype).itemsize
    f_tile = choose_f_tile(B, nf, d_in, d_out, itemsize)
    w_packed, b_packed = pack_nlinear_params(weight, bias, f_tile, compute_dtype)
    return nlinear_prepacked(x, w_packed, b_packed, f_tile=f_tile,
                             compute_dtype=compute_dtype)


def init_nlinear_params(key, n_features, d_in, d_out, dtype=jnp.float32):
    """Deterministic init mimicking torch.nn.Linear (uniform +/- 1/sqrt(d_in))."""
    kw, kb = jax.random.split(key)
    bound = 1.0 / math.sqrt(d_in)
    weight = jax.random.uniform(kw, (n_features, d_in, d_out), dtype=dtype,
                                minval=-bound, maxval=bound)
    bias = jax.random.uniform(kb, (n_features, d_out), dtype=dtype,
                              minval=-bound, maxval=bound)
    return weight, bias


if __name__ == "__main__":
    key = jax.random.PRNGKey(0)
    k1, k2, k3, k4 = jax.random.split(key, 4)
    # Tolerances accommodate the MXU's f32 multi-pass accumulation while still
    # catching any structural error (wrong packing, OOB lanes, missing bias).
    TOL = dict(atol=2e-2, rtol=2e-2)

    # --- case 1: small dims -> single feature group (f_tile == n_features) -----
    B, nf, d_in, d_out = 4, 4, 8, 32
    x = jax.random.normal(k1, (B, nf, d_in), dtype=jnp.float32)
    weight, bias = init_nlinear_params(k2, nf, d_in, d_out)

    f_tile = choose_f_tile(B, nf, d_in, d_out, x.dtype.itemsize)
    # Pack ONCE (outside the per-call hot path), then jit the pre-packed forward.
    w_packed, b_packed = pack_nlinear_params(weight, bias, f_tile)
    fwd = jax.jit(functools.partial(nlinear_prepacked, f_tile=f_tile))
    out = jax.block_until_ready(fwd(x, w_packed, b_packed))
    ref = (x[..., None] * weight[None]).sum(-2) + bias[None]
    assert out.shape == (B, nf, d_out)
    assert jnp.allclose(out, ref, **TOL), "case 1 (bias) mismatch"

    # no-bias path via the convenience wrapper
    out_nb = jax.block_until_ready(jax.jit(nlinear)(x, weight, None))
    ref_nb = (x[..., None] * weight[None]).sum(-2)
    assert jnp.allclose(out_nb, ref_nb, **TOL), "case 1 (no-bias) mismatch"

    # --- case 2: n_features not divisible by the feature tile (padding path) ---
    B2, nf2, d_in2, d_out2 = 16, 3, 128, 64
    xb = jax.random.normal(k3, (B2, nf2, d_in2), dtype=jnp.float32)
    wb, bb = init_nlinear_params(k4, nf2, d_in2, d_out2)
    f_tile2 = choose_f_tile(B2, nf2, d_in2, d_out2, xb.dtype.itemsize)
    wp2, bp2 = pack_nlinear_params(wb, bb, f_tile2)
    out2 = jax.block_until_ready(
        jax.jit(functools.partial(nlinear_prepacked, f_tile=f_tile2))(xb, wp2, bp2))
    ref2 = (xb[..., None] * wb[None]).sum(-2) + bb[None]
    assert out2.shape == (B2, nf2, d_out2)
    assert jnp.allclose(out2, ref2, **TOL), "case 2 (padded feature axis) mismatch"

    print("KERNEL_OK")
</pallas_src>

<mosaic_0001>
module attributes {stable_mosaic.version = 11 : i64} {
  func.func @_nlinear_kernel_bias(%arg0: i32, %arg1: i32, %arg2: memref<4x32xf32, #tpu.memory_space<vmem>>, %arg3: memref<1x32x128xf32, #tpu.memory_space<vmem>>, %arg4: memref<1x128xf32, #tpu.memory_space<vmem>>, %arg5: memref<4x128xf32, #tpu.memory_space<vmem>>) attributes {dimension_semantics = [#tpu.dimension_semantics<parallel>, #tpu.dimension_semantics<parallel>], iteration_bounds = array<i64: 1, 1>, scalar_prefetch = 0 : i64, scratch_operands = 0 : i64, tpu.core_type = #tpu.core_type<tc>, window_params = [{transform_indices = @transform_0, window_bounds = array<i64: 4, 32>}, {transform_indices = @transform_1, window_bounds = array<i64: 1, 32, 128>}, {transform_indices = @transform_2, window_bounds = array<i64: 1, 128>}, {transform_indices = @transform_3, window_bounds = array<i64: 4, 128>}]} {
    %c0 = arith.constant 0 : index
    %c0_0 = arith.constant 0 : index
    %0 = vector.load %arg2[%c0, %c0_0] : memref<4x32xf32, #tpu.memory_space<vmem>>, vector<4x32xf32>
    %c0_1 = arith.constant 0 : index
    %c0_2 = arith.constant 0 : index
    %c0_3 = arith.constant 0 : index
    %1 = vector.load %arg3[%c0_1, %c0_2, %c0_3] : memref<1x32x128xf32, #tpu.memory_space<vmem>>, vector<1x32x128xf32>
    %2 = vector.shape_cast %1 : vector<1x32x128xf32> to vector<32x128xf32>
    %cst = arith.constant dense<0.000000e+00> : vector<4x128xf32>
    %3 = tpu.matmul %0, %2, %cst {dimension_numbers = #tpu.dot_dimension_numbers<[1], [0], [0], [1], [0, 0, 1, 1], [], []>} : vector<4x32xf32>, vector<32x128xf32>, vector<4x128xf32> -> vector<4x128xf32>
    %c0_4 = arith.constant 0 : index
    %c0_5 = arith.constant 0 : index
    %4 = vector.load %arg4[%c0_4, %c0_5] : memref<1x128xf32, #tpu.memory_space<vmem>>, vector<1x128xf32>
    %5 = vector.broadcast %4 : vector<1x128xf32> to vector<4x128xf32>
    %6 = arith.addf %3, %5 : vector<4x128xf32>
    %c0_6 = arith.constant 0 : index
    %c0_7 = arith.constant 0 : index
    %7 = vector.load %arg5[%c0_6, %c0_7] : memref<4x128xf32, #tpu.memory_space<vmem>>, vector<4x128xf32>
    tpu.vector_store %arg5[%c0_6, %c0_7], %6 {strides = array<i32>} : memref<4x128xf32, #tpu.memory_space<vmem>>, vector<4x128xf32>,
    return
  }
  func.func @transform_0(%arg0: i32, %arg1: i32) -> (i32, i32) {
    %c0_i32 = arith.constant 0 : i32
    return %arg1, %arg0 : i32, i32
  }
  func.func @transform_1(%arg0: i32, %arg1: i32) -> (i32, i32, i32) {
    %c0_i32 = arith.constant 0 : i32
    %c0_i32_0 = arith.constant 0 : i32
    %c0_i32_1 = arith.constant 0 : i32
    return %arg0, %c0_i32, %c0_i32_0 : i32, i32, i32
  }
  func.func @transform_2(%arg0: i32, %arg1: i32) -> (i32, i32) {
    %c0_i32 = arith.constant 0 : i32
    %c0_i32_0 = arith.constant 0 : i32
    return %c0_i32, %arg0 : i32, i32
  }
  func.func @transform_3(%arg0: i32, %arg1: i32) -> (i32, i32) {
    %c0_i32 = arith.constant 0 : i32
    return %arg1, %arg0 : i32, i32
  }
}

</mosaic_0001>

<llo_original>
// kernel: nlinear_prepacked.1
$region0: #{nlinear_prepacked.1}
  #allocation0 [shape = 'u32[]', space=smem, size = 0x4, offset = 0x4, fixed_abs, tag = 'smem constant byte address 0x4 - core index']
  #allocation1 [shape = 'u32[144,128]{1,0:T(1,128)}', space=vmem, size = 0x12000, scoped, tag = 'internal scratch']
  %s0 = inlined_call_operand.vmem [shape: f32[4,32], index: 0, kind: input, shape index: {}]
  %s1 = inlined_call_operand.hbm [shape: f32[1,32,128], index: 1, kind: input, shape index: {}]
  %s2 = inlined_call_operand.vmem [shape: f32[1,128], index: 2, kind: input, shape index: {}]
  %s3 = inlined_call_operand.vmem [shape: f32[4,128], index: 3, kind: output, shape index: {}]
  %s4 = sld [smem:[#allocation0]]
  $region26: #{nlinear_prepacked.1} parent=0
    _
  %s6 = ssub.s32 1, %s4
  %s7 = scalar_select 0, %s6, %s4
  $region1: #{nlinear_prepacked.1} parent=0
    #allocation2 [shape = 'u8[16384]{0}', space=vmem, size = 0x4000, scoped, tag = 'input window, operand 1, single buffered']
    #allocation3 [shape = 's32[1]{0}', space=sflag, size = 0x4, scoped, tag = 'scoped memory for nlinear_prepacked.1']
    %8 = vsyncpa [#allocation3], 0
    // Predicated region
    $region2: #{nlinear_prepacked.1} parent=1 // pred_check
      _
    $region3: #{nlinear_prepacked.1} parent=1 // pred_check_branch
      %10 = sbr.rel (0) target = $region5
    $region4: #{nlinear_prepacked.1} parent=1 // pred_region
      _
    $region5: #{nlinear_prepacked.1} parent=1 // pred_fallthru
      _
    // Predicated region
    $region6: #{nlinear_prepacked.1} parent=1 // pred_check
      _
    $region7: #{nlinear_prepacked.1} parent=1 // pred_check_branch
      %12 = sbr.rel (0) target = $region9
    $region8: #{nlinear_prepacked.1} parent=1 // pred_region
      %s14 = ssub.s32 512, 512
      %15 = vsyncadd [#allocation3], %s14
      %s16 = sshll.u32 [#allocation2], 4
      %s17 = int_to_ptr.vmem [resolvable:$true] %s16
      %22 = dma.hbm_to_vmem [thread:$0]  %s1, 512, %s17, [#allocation3], 128, 128, 8
    $region9: #{nlinear_prepacked.1} parent=1 // pred_fallthru
      _
    // Predicated region
    $region10: #{nlinear_prepacked.1} parent=1 // pred_check
      _
    $region11: #{nlinear_prepacked.1} parent=1 // pred_check_branch
      %24 = sbr.rel (0) target = $region13
    $region12: #{nlinear_prepacked.1} parent=1 // pred_region
      _
    $region13: #{nlinear_prepacked.1} parent=1 // pred_fallthru
      _
    // Predicated region
    $region14: #{nlinear_prepacked.1} parent=1 // pred_check
      _
    $region15: #{nlinear_prepacked.1} parent=1 // pred_check_branch
      %26 = sbr.rel (0) target = $region17
    $region16: #{nlinear_prepacked.1} parent=1 // pred_region
      %27 = dma.done [#allocation3], 512
    $region17: #{nlinear_prepacked.1} parent=1 // pred_fallthru
      _
    %v28 = vld [vmem:[%s0] sm:$0xf]
    %v29 = vld [vmem:[#allocation2] sm:$0xff]
    %v30 = vld [vmem:[#allocation2 + $0x8] sm:$0xff]
    %v31 = vld [vmem:[#allocation2 + $0x10] sm:$0xff]
    %v32 = vld [vmem:[#allocation2 + $0x18] sm:$0xff]
    %v33 = vld [vmem:[%s2] sm:$0x1]
    %v35 = vlaneseq
    %v36 = vshrl.u32 %v35, 7
    %v37 = vsub.s32 0, %v36
    %v38 = vrot.slane %v33, %v37
    %vm40 = vcmask 261120
    %v42 = vsel %vm40, %v28, 0
    %44 = vmatprep.subr.mxu0 0.0
    %45 = vmatpush1.msra.mxu0 0.0
    %46 = vmatprep.subr.mxu0 0.0
    %47 = vmatpush1.msra.mxu0 0.0
    %48 = vmatprep.subr.mxu0 0.0
    %49 = vmatpush1.msra.mxu0 0.0
    %50 = vmatprep.subr.mxu0 0.0
    %51 = vmatpush1.msra.mxu0 0.0
    %52 = vmatprep.subr.mxu0 0.0
    %53 = vmatpush1.msra.mxu0 0.0
    %54 = vmatprep.subr.mxu0 0.0
    %55 = vmatpush1.msra.mxu0 0.0
    %56 = vmatprep.subr.mxu0 0.0
    %57 = vmatpush1.msra.mxu0 0.0
    %58 = vmatprep.subr.mxu0 0.0
    %59 = vmatpush1.msra.mxu0 0.0
    %60 = vmatprep.subr.mxu0 0.0
    %61 = vmatpush1.msra.mxu0 0.0
    %62 = vmatprep.subr.mxu0 0.0
    %63 = vmatpush1.msra.mxu0 0.0
    %64 = vmatprep.subr.mxu0 0.0
    %65 = vmatpush1.msra.mxu0 0.0
    %66 = vmatprep.subr.mxu0 0.0
    %67 = vmatpush1.msra.mxu0 0.0
    %68 = vmatprep.subr.mxu0 0.0
    %69 = vmatpush1.msra.mxu0 %v32
    %70 = vmatprep.subr.mxu0 0.0
    %71 = vmatpush1.msra.mxu0 %v31
    %72 = vmatprep.subr.mxu0 0.0
    %73 = vmatpush1.msra.mxu0 %v30
    %74 = vmatprep.subr.mxu0 0.0
    %75 = vmatpush1.msra.mxu0 %v29
    %76 = vmatprep.subr.mxu0 0.0
    %77 = vmatpush2.msra.mxu0 0.0
    %78 = vmatprep.subr.mxu0 0.0
    %79 = vmatpush2.msra.mxu0 0.0
    %80 = vmatprep.subr.mxu0 0.0
    %81 = vmatpush2.msra.mxu0 0.0
    %82 = vmatprep.subr.mxu0 0.0
    %83 = vmatpush2.msra.mxu0 0.0
    %84 = vmatprep.subr.mxu0 0.0
    %85 = vmatpush2.msra.mxu0 0.0
    %86 = vmatprep.subr.mxu0 0.0
    %87 = vmatpush2.msra.mxu0 0.0
    %88 = vmatprep.subr.mxu0 0.0
    %89 = vmatpush2.msra.mxu0 0.0
    %90 = vmatprep.subr.mxu0 0.0
    %91 = vmatpush2.msra.mxu0 0.0
    %92 = vmatprep.subr.mxu0 0.0
    %93 = vmatpush2.msra.mxu0 0.0
    %94 = vmatprep.subr.mxu0 0.0
    %95 = vmatpush2.msra.mxu0 0.0
    %96 = vmatprep.subr.mxu0 0.0
    %97 = vmatpush2.msra.mxu0 0.0
    %98 = vmatprep.subr.mxu0 0.0
    %99 = vmatpush2.msra.mxu0 0.0
    %100 = vmatprep.subr.mxu0 0.0
    %101 = vmatpush2.msra.mxu0 0.0
    %102 = vmatprep.subr.mxu0 0.0
    %103 = vmatpush2.msra.mxu0 0.0
    %104 = vmatprep.subr.mxu0 0.0
    %105 = vmatpush2.msra.mxu0 0.0
    %106 = vmatprep.subr.mxu0 0.0
    %107 = vmatpush2.msra.mxu0 0.0
    %108 = vmatprep.mubr.f32.mxu0 0.0
    %109 = vmatmul.mubr.f32.gmra.mxu0 %v42
    %v110 = vpop.f32.mrf.mxu0
    %v111 = vadd.f32 %v38, %v110
    %v112 = vpop.f32.mrf.mxu0
    %113 = vdwg.mxu0
    %114 = vst [vmem:[%s3] sm:$0xf] %v111
    // Predicated region
    $region18: #{nlinear_prepacked.1} parent=1 // pred_check
      _
    $region19: #{nlinear_prepacked.1} parent=1 // pred_check_branch
      %116 = sbr.rel (0) target = $region21
    $region20: #{nlinear_prepacked.1} parent=1 // pred_region
      _
    $region21: #{nlinear_prepacked.1} parent=1 // pred_fallthru
      _
    // Predicated region
    $region22: #{nlinear_prepacked.1} parent=1 // pred_check
      _
    $region23: #{nlinear_prepacked.1} parent=1 // pred_check_branch
      %118 = sbr.rel (0) target = $region25
    $region24: #{nlinear_prepacked.1} parent=1 // pred_region
      _
    $region25: #{nlinear_prepacked.1} parent=1 // pred_fallthru
      _
    %119 = vsyncpa [#allocation3], 1

</llo_original>
